<compile_context>
chip_gen: v6e
topology: v6e:2x2x1
jax: 0.10.0
libtpu: 0.0.40
codegen_flags: <defaults>
</compile_context>

<pallas_src>
import functools

import jax
import jax.numpy as jnp
from jax.experimental import pallas as pl
from jax.experimental.pallas import tpu as pltpu


# --------------------------- generation-aware knobs ---------------------------
@functools.lru_cache(maxsize=None)
def _vmem_capacity_bytes():
    try:
        return int(pltpu.get_tpu_info().vmem_capacity_bytes)
    except Exception:
        return 64 * 1024 * 1024          # conservative (v7x per-core VMEM)


def _vmem_limit_bytes():
    # ~5/8 of physical: ~40 MiB on v7x (64 MiB), ~80 MiB on v5e/v6e (128 MiB).
    return min((_vmem_capacity_bytes() * 5) // 8, 96 * 1024 * 1024)


def _default_row_block():
    # Bigger row tiles on 128 MiB parts (v5e/v6e), smaller on v7x (64 MiB).
    return 512 if _vmem_capacity_bytes() >= 96 * 1024 * 1024 else 256


@functools.lru_cache(maxsize=None)
def _single_buffer_supported():
    """Probe whether this JAX build accepts pipeline_mode=pl.Buffered(1)
    (single-buffered grid-invariant weight blocks)."""
    def _copy(x_ref, o_ref):
        o_ref[...] = x_ref[...]
    try:
        spec = pl.BlockSpec((8, 128), lambda i: (0, 0),
                            pipeline_mode=pl.Buffered(1))
        pl.pallas_call(
            _copy, grid=(1,), in_specs=[spec],
            out_specs=pl.BlockSpec((8, 128), lambda i: (0, 0)),
            out_shape=jax.ShapeDtypeStruct((8, 128), jnp.float32),
        )(jnp.zeros((8, 128), jnp.float32))
        return True
    except Exception:
        return False


def _resident_spec(shape, index_map):
    """BlockSpec for a grid-invariant weight operand: single-buffered when the
    JAX build supports it (halves its resident VMEM), else default buffering."""
    if _single_buffer_supported():
        return pl.BlockSpec(shape, index_map, pipeline_mode=pl.Buffered(1))
    return pl.BlockSpec(shape, index_map)


def _heads_per_block(n_head, d_k, d_v, L, d_model, has_prev, budget_bytes):
    """Largest head-pack hp (divisor of n_head) with a legal lane layout whose
    double-buffered attention tiles stay within the VMEM budget."""
    best_fit = smallest_legal = None
    for hp in range(1, n_head + 1):
        if n_head % hp:
            continue
        lane_ok = (hp == n_head) or (hp * d_k % 128 == 0 and hp * d_v % 128 == 0)
        if not lane_ok:
            continue
        if smallest_legal is None:
            smallest_legal = hp
        # Double-buffered bf16 x / weight / ctx tiles + f32 scores (+prev)
        # tiles, plus the live f32 qkv / score intermediates.
        est = 2 * (2 * L * d_model
                   + 2 * d_model * hp * (2 * d_k + d_v)
                   + 2 * L * hp * d_v
                   + 4 * hp * L * L * (1 + int(has_prev)))
        est += 4 * L * hp * (2 * d_k + d_v) + 8 * L * L
        if est <= budget_bytes:
            best_fit = hp
    # TODO(synk): flash-style L tiling so long sequences always fit; until then
    # fall back to the smallest layout-legal hp even if it exceeds the budget.
    return best_fit if best_fit is not None else smallest_legal


# ---- Kernel 1: fused QKV projection + RealFormer attention (hp heads/step) ----
def qkv_attn_kernel(*refs, hp, d_k, d_v, has_prev, dtype):
    if has_prev:
        x_ref, w_ref, prev_ref, scores_ref, ctx_ref = refs
    else:
        x_ref, w_ref, scores_ref, ctx_ref = refs
        prev_ref = None

    # Fused QKV projection for this (head-block, batch): one wide MXU matmul.
    x = x_ref[0]                                   # (L, d_model) compute dtype
    y = jnp.dot(x, w_ref[...], preferred_element_type=jnp.float32)
    nq = hp * d_k
    q = y[:, :nq]                                  # 1/sqrt(d_k) folded into Wq
    k = y[:, nq:2 * nq]
    v = y[:, 2 * nq:]

    dn = (((1,), (1,)), ((), ()))                  # contract last dims -> q @ k^T
    ctx_parts = []
    for h in range(hp):                            # static unroll over packed heads
        qh = q[:, h * d_k:(h + 1) * d_k].astype(dtype)
        kh = k[:, h * d_k:(h + 1) * d_k].astype(dtype)
        vh = v[:, h * d_v:(h + 1) * d_v].astype(dtype)

        s = jax.lax.dot_general(qh, kh, dn, preferred_element_type=jnp.float32)
        if has_prev:
            s = s + prev_ref[0, h]
        scores_ref[0, h] = s                       # RealFormer pre-softmax scores

        m = jnp.max(s, axis=-1, keepdims=True)
        e = jnp.exp(s - m)
        p = e * pl.reciprocal(jnp.sum(e, axis=-1, keepdims=True), approx=True)
        ctx_parts.append(jnp.dot(p.astype(dtype), vh,
                                 preferred_element_type=jnp.float32))

    # Single lane-dense store of all hp heads' context (bf16 to HBM).
    ctx_ref[0] = jnp.concatenate(ctx_parts, axis=-1).astype(ctx_ref.dtype)


# -- Kernel 2: fc proj + residual + LN1 + FFN + residual + LN2 (row-tiled) -----
def post_ffn_kernel(ctx_ref, res_ref, wfc_ref, g1_ref, b1_ref,
                    w1_ref, bb1_ref, w2_ref, bb2_ref, g2_ref, b2_ref,
                    out_ref, *, dtype):
    def layernorm(x, g, b):
        mu = jnp.mean(x, axis=-1, keepdims=True)
        var = jnp.mean((x - mu) ** 2, axis=-1, keepdims=True)
        return (x - mu) * jax.lax.rsqrt(var + 1e-6) * g + b

    y = jnp.dot(ctx_ref[...], wfc_ref[...],
                preferred_element_type=jnp.float32) + res_ref[...]
    y = layernorm(y, g1_ref[...], b1_ref[...])                    # attn output

    h = jnp.maximum(
        jnp.dot(y.astype(dtype), w1_ref[...],
                preferred_element_type=jnp.float32) + bb1_ref[...], 0.0)
    z = jnp.dot(h.astype(dtype), w2_ref[...],
                preferred_element_type=jnp.float32) + bb2_ref[...] + y
    out_ref[...] = layernorm(z, g2_ref[...], b2_ref[...])


# ------------------------------- wrapper --------------------------------------
def realformer_encoder_layer(enc_input, params, pre_attn=None, slf_attn_mask=None,
                             compute_dtype=jnp.bfloat16, row_block=None):
    assert slf_attn_mask is None, "mask path not implemented"  # TODO(synk)
    B, L, d_model = enc_input.shape
    n_head, d_k, d_v = params["n_head"], params["d_k"], params["d_v"]
    BL = B * L
    n_qk, n_v = n_head * d_k, n_head * d_v
    d_inner = params["w1"].shape[1]
    has_prev = pre_attn is not None

    vmem_limit = _vmem_limit_bytes()
    rows = min(row_block or _default_row_block(), BL)
    n_row_blocks = pl.cdiv(BL, rows)

    x3d = enc_input.astype(compute_dtype)               # MXU feed (bf16)
    x2d_res = enc_input.reshape(BL, d_model).astype(jnp.float32)  # exact residual

    # ---- head-blocked, scale-folded, bf16 QKV weight (one-time prep) ----
    hp = _heads_per_block(n_head, d_k, d_v, L, d_model, has_prev,
                          budget_bytes=vmem_limit // 3)
    n_hb = n_head // hp
    wblk_cols = hp * (2 * d_k + d_v)
    w = params["w_qkv"]
    wq = (w[:, :n_qk] * (1.0 / (d_k ** 0.5))).reshape(d_model, n_hb, hp * d_k)
    wk = w[:, n_qk:2 * n_qk].reshape(d_model, n_hb, hp * d_k)
    wv = w[:, 2 * n_qk:].reshape(d_model, n_hb, hp * d_v)
    w_blk = jnp.concatenate([wq, wk, wv], axis=-1).reshape(
        d_model, n_hb * wblk_cols).astype(compute_dtype)

    # ---- 1) fused QKV + attention: grid (head_blocks, batch) ----
    attn_inputs = [x3d, w_blk]
    attn_in_specs = [
        pl.BlockSpec((1, L, d_model), lambda h, b: (b, 0, 0)),
        pl.BlockSpec((d_model, wblk_cols), lambda h, b: (0, h)),  # batch-resident
    ]
    if has_prev:
        attn_inputs.append(pre_attn.astype(jnp.float32))
        attn_in_specs.append(pl.BlockSpec((1, hp, L, L),
                                          lambda h, b: (b, h, 0, 0)))

    attn_cost = pl.CostEstimate(
        flops=2 * BL * d_model * (2 * n_qk + n_v)
              + 2 * B * n_head * L * L * (d_k + d_v) + 5 * B * n_head * L * L,
        transcendentals=B * n_head * L * L,
        bytes_accessed=2 * (B * n_hb * L * d_model + d_model * (2 * n_qk + n_v)
                            + BL * n_v)
                       + 4 * (1 + int(has_prev)) * B * n_head * L * L)

    scores, ctx3d = pl.pallas_call(
        functools.partial(qkv_attn_kernel, hp=hp, d_k=d_k, d_v=d_v,
                          has_prev=has_prev, dtype=compute_dtype),
        grid=(n_hb, B),
        in_specs=attn_in_specs,
        out_specs=(
            pl.BlockSpec((1, hp, L, L), lambda h, b: (b, h, 0, 0)),
            pl.BlockSpec((1, L, hp * d_v), lambda h, b: (b, 0, h)),
        ),
        out_shape=(
            jax.ShapeDtypeStruct((B, n_head, L, L), jnp.float32),
            jax.ShapeDtypeStruct((B, L, n_v), compute_dtype),
        ),
        compiler_params=pltpu.CompilerParams(
            dimension_semantics=("parallel", "parallel"),
            vmem_limit_bytes=vmem_limit),
        cost_estimate=attn_cost,
    )(*attn_inputs)

    ctx2d = ctx3d.reshape(BL, n_v)

    # ---- 2) fused fc+LN1+FFN+LN2 (row-tiled, bf16 weights resident) ----
    wfc = params["w_fc"].astype(compute_dtype)
    w1 = params["w1"].astype(compute_dtype)
    w2 = params["w2"].astype(compute_dtype)

    post_cost = pl.CostEstimate(
        flops=2 * BL * (n_v * d_model + 2 * d_model * d_inner) + 20 * BL * d_model,
        transcendentals=2 * BL,
        bytes_accessed=2 * (BL * n_v + n_v * d_model + 2 * d_model * d_inner)
                       + 4 * (2 * BL * d_model + 2 * d_inner + 6 * d_model))

    out2d = pl.pallas_call(
        functools.partial(post_ffn_kernel, dtype=compute_dtype),
        grid=(n_row_blocks,),
        in_specs=[
            pl.BlockSpec((rows, n_v), lambda i: (i, 0)),          # ctx (bf16)
            pl.BlockSpec((rows, d_model), lambda i: (i, 0)),      # residual x (f32)
            _resident_spec((n_v, d_model), lambda i: (0, 0)),     # w_fc
            pl.BlockSpec((1, d_model), lambda i: (0, 0)),         # ln1_g
            pl.BlockSpec((1, d_model), lambda i: (0, 0)),         # ln1_b
            _resident_spec((d_model, d_inner), lambda i: (0, 0)),  # w1
            pl.BlockSpec((1, d_inner), lambda i: (0, 0)),         # b1
            _resident_spec((d_inner, d_model), lambda i: (0, 0)),  # w2
            pl.BlockSpec((1, d_model), lambda i: (0, 0)),         # b2
            pl.BlockSpec((1, d_model), lambda i: (0, 0)),         # ln2_g
            pl.BlockSpec((1, d_model), lambda i: (0, 0)),         # ln2_b
        ],
        out_specs=pl.BlockSpec((rows, d_model), lambda i: (i, 0)),
        out_shape=jax.ShapeDtypeStruct((BL, d_model), jnp.float32),
        compiler_params=pltpu.CompilerParams(
            dimension_semantics=("parallel",), vmem_limit_bytes=vmem_limit),
        cost_estimate=post_cost,
    )(ctx2d, x2d_res, wfc, params["ln1_g"], params["ln1_b"],
      w1, params["b1"], w2, params["b2"], params["ln2_g"], params["ln2_b"])

    return out2d.reshape(B, L, d_model), scores


# ------------------------------ params ----------------------------------------
def init_params(key, d_model, d_inner, n_head, d_k, d_v):
    ks = jax.random.split(key, 8)
    s = 0.02
    w_qs = s * jax.random.normal(ks[0], (d_model, n_head * d_k), jnp.float32)
    w_ks = s * jax.random.normal(ks[1], (d_model, n_head * d_k), jnp.float32)
    w_vs = s * jax.random.normal(ks[2], (d_model, n_head * d_v), jnp.float32)
    return {
        "n_head": n_head, "d_k": d_k, "d_v": d_v,
        # QKV weights concatenated once at init ([Q | K | V], head-major cols)
        "w_qkv": jnp.concatenate([w_qs, w_ks, w_vs], axis=1),
        "w_fc": s * jax.random.normal(ks[3], (n_head * d_v, d_model), jnp.float32),
        "ln1_g": jnp.ones((1, d_model), jnp.float32),
        "ln1_b": jnp.zeros((1, d_model), jnp.float32),
        "w1": s * jax.random.normal(ks[4], (d_model, d_inner), jnp.float32),
        "b1": s * jax.random.normal(ks[5], (1, d_inner), jnp.float32),
        "w2": s * jax.random.normal(ks[6], (d_inner, d_model), jnp.float32),
        "b2": s * jax.random.normal(ks[7], (1, d_model), jnp.float32),
        "ln2_g": jnp.ones((1, d_model), jnp.float32),
        "ln2_b": jnp.zeros((1, d_model), jnp.float32),
    }


# --------------------------- pure-JAX reference --------------------------------
def _reference(enc_input, params, pre_attn):
    B, L, d_model = enc_input.shape
    H, dk, dv = params["n_head"], params["d_k"], params["d_v"]
    w = params["w_qkv"]
    wq, wk, wv = w[:, :H * dk], w[:, H * dk:2 * H * dk], w[:, 2 * H * dk:]
    x = enc_input
    q = (x @ wq).reshape(B, L, H, dk).transpose(0, 2, 1, 3)
    k = (x @ wk).reshape(B, L, H, dk).transpose(0, 2, 1, 3)
    v = (x @ wv).reshape(B, L, H, dv).transpose(0, 2, 1, 3)
    s = jnp.einsum("bhid,bhjd->bhij", q / (dk ** 0.5), k)
    if pre_attn is not None:
        s = s + pre_attn
    p = jax.nn.softmax(s, axis=-1)
    ctx = jnp.einsum("bhij,bhjd->bhid", p, v).transpose(0, 2, 1, 3).reshape(B, L, H * dv)

    def ln(y, g, b):
        mu = y.mean(-1, keepdims=True)
        var = ((y - mu) ** 2).mean(-1, keepdims=True)
        return (y - mu) * jax.lax.rsqrt(var + 1e-6) * g + b

    a = ln(ctx @ params["w_fc"] + x, params["ln1_g"], params["ln1_b"])
    h = jnp.maximum(a @ params["w1"] + params["b1"], 0.0)
    o = ln(h @ params["w2"] + params["b2"] + a, params["ln2_g"], params["ln2_b"])
    return o, s


# --------------------------------- main ----------------------------------------
if __name__ == "__main__":
    B, L = 2, 8
    d_model, d_inner, n_head, d_k, d_v = 32, 64, 4, 8, 8

    key = jax.random.PRNGKey(0)
    k_param, k_x, k_prev = jax.random.split(key, 3)

    params = init_params(k_param, d_model, d_inner, n_head, d_k, d_v)
    enc_input = jax.random.normal(k_x, (B, L, d_model), jnp.float32)
    pre_attn = 0.1 * jax.random.normal(k_prev, (B, n_head, L, L), jnp.float32)

    enc_output, enc_slf_attn = realformer_encoder_layer(
        enc_input, params, pre_attn=pre_attn, slf_attn_mask=None)
    # pre_attn=None fast path: no zero [B,H,L,L] tensor is materialized.
    enc_output0, enc_slf_attn0 = realformer_encoder_layer(
        enc_input, params, pre_attn=None, slf_attn_mask=None)
    jax.block_until_ready((enc_output, enc_slf_attn, enc_output0, enc_slf_attn0))

    assert enc_output.shape == (B, L, d_model)
    assert enc_slf_attn.shape == (B, n_head, L, L)

    ref_out, ref_scores = _reference(enc_input, params, pre_attn)
    assert jnp.allclose(enc_output, ref_out, atol=2e-2, rtol=2e-2)
    assert jnp.allclose(enc_slf_attn, ref_scores, atol=2e-2, rtol=2e-2)
    ref_out0, ref_scores0 = _reference(enc_input, params, None)
    assert jnp.allclose(enc_output0, ref_out0, atol=2e-2, rtol=2e-2)
    assert jnp.allclose(enc_slf_attn0, ref_scores0, atol=2e-2, rtol=2e-2)

    print("KERNEL_OK")
</pallas_src>

<mosaic_0001>
module attributes {stable_mosaic.version = 11 : i64} {
  func.func @qkv_attn_kernel(%arg0: i32, %arg1: i32, %arg2: memref<1x8x32xbf16, #tpu.memory_space<vmem>>, %arg3: memref<32x96xbf16, #tpu.memory_space<vmem>>, %arg4: memref<1x4x8x8xf32, #tpu.memory_space<vmem>>, %arg5: memref<1x4x8x8xf32, #tpu.memory_space<vmem>>, %arg6: memref<1x8x32xbf16, #tpu.memory_space<vmem>>) attributes {dimension_semantics = [#tpu.dimension_semantics<parallel>, #tpu.dimension_semantics<parallel>], iteration_bounds = array<i64: 1, 2>, scalar_prefetch = 0 : i64, scratch_operands = 0 : i64, tpu.core_type = #tpu.core_type<tc>, window_params = [{transform_indices = @transform_0, window_bounds = array<i64: 1, 8, 32>}, {transform_indices = @transform_1, window_bounds = array<i64: 32, 96>}, {transform_indices = @transform_2, window_bounds = array<i64: 1, 4, 8, 8>}, {transform_indices = @transform_3, window_bounds = array<i64: 1, 4, 8, 8>}, {transform_indices = @transform_4, window_bounds = array<i64: 1, 8, 32>}]} {
    %c0 = arith.constant 0 : index
    %c0_0 = arith.constant 0 : index
    %c0_1 = arith.constant 0 : index
    %0 = vector.load %arg2[%c0, %c0_0, %c0_1] : memref<1x8x32xbf16, #tpu.memory_space<vmem>>, vector<1x8x32xbf16>
    %1 = vector.shape_cast %0 : vector<1x8x32xbf16> to vector<8x32xbf16>
    %c0_2 = arith.constant 0 : index
    %c0_3 = arith.constant 0 : index
    %2 = vector.load %arg3[%c0_2, %c0_3] : memref<32x96xbf16, #tpu.memory_space<vmem>>, vector<32x96xbf16>
    %cst = arith.constant dense<0.000000e+00> : vector<8x96xf32>
    %3 = tpu.matmul %1, %2, %cst {dimension_numbers = #tpu.dot_dimension_numbers<[1], [0], [0], [1], [0, 0, 1, 1], [], []>} : vector<8x32xbf16>, vector<32x96xbf16>, vector<8x96xf32> -> vector<8x96xf32>
    %4 = vector.extract_strided_slice %3 {offsets = [0, 0], sizes = [8, 32], strides = [1, 1]} : vector<8x96xf32> to vector<8x32xf32>
    %5 = vector.extract_strided_slice %3 {offsets = [0, 32], sizes = [8, 32], strides = [1, 1]} : vector<8x96xf32> to vector<8x32xf32>
    %6 = vector.extract_strided_slice %3 {offsets = [0, 64], sizes = [8, 32], strides = [1, 1]} : vector<8x96xf32> to vector<8x32xf32>
    %7 = vector.extract_strided_slice %4 {offsets = [0, 0], sizes = [8, 8], strides = [1, 1]} : vector<8x32xf32> to vector<8x8xf32>
    %8 = arith.truncf %7 : vector<8x8xf32> to vector<8x8xbf16>
    %9 = vector.extract_strided_slice %5 {offsets = [0, 0], sizes = [8, 8], strides = [1, 1]} : vector<8x32xf32> to vector<8x8xf32>
    %10 = arith.truncf %9 : vector<8x8xf32> to vector<8x8xbf16>
    %11 = vector.extract_strided_slice %6 {offsets = [0, 0], sizes = [8, 8], strides = [1, 1]} : vector<8x32xf32> to vector<8x8xf32>
    %12 = arith.truncf %11 : vector<8x8xf32> to vector<8x8xbf16>
    %cst_4 = arith.constant dense<0.000000e+00> : vector<8x8xf32>
    %13 = tpu.matmul %8, %10, %cst_4 {dimension_numbers = #tpu.dot_dimension_numbers<[1], [1], [0], [0], [0, 0, 1, 0], [], []>} : vector<8x8xbf16>, vector<8x8xbf16>, vector<8x8xf32> -> vector<8x8xf32>
    %c0_5 = arith.constant 0 : index
    %c0_6 = arith.constant 0 : index
    %c0_7 = arith.constant 0 : index
    %c0_8 = arith.constant 0 : index
    %14 = vector.load %arg4[%c0_5, %c0_6, %c0_7, %c0_8] : memref<1x4x8x8xf32, #tpu.memory_space<vmem>>, vector<1x1x8x8xf32>
    %15 = vector.shape_cast %14 : vector<1x1x8x8xf32> to vector<8x8xf32>
    %16 = arith.addf %13, %15 : vector<8x8xf32>
    %c0_9 = arith.constant 0 : index
    %c0_10 = arith.constant 0 : index
    %c0_11 = arith.constant 0 : index
    %c0_12 = arith.constant 0 : index
    %17 = vector.load %arg5[%c0_9, %c0_10, %c0_11, %c0_12] : memref<1x4x8x8xf32, #tpu.memory_space<vmem>>, vector<1x1x8x8xf32>
    %18 = vector.shape_cast %17 : vector<1x1x8x8xf32> to vector<8x8xf32>
    %19 = vector.shape_cast %16 : vector<8x8xf32> to vector<1x1x8x8xf32>
    tpu.vector_store %arg5[%c0_9, %c0_10, %c0_11, %c0_12], %19 {strides = array<i32>} : memref<1x4x8x8xf32, #tpu.memory_space<vmem>>, vector<1x1x8x8xf32>,
    %cst_13 = arith.constant dense<0xFF800000> : vector<8xf32>
    %20 = vector.multi_reduction <maximumf>, %16, %cst_13 [1] : vector<8x8xf32> to vector<8xf32>
    %21 = vector.shape_cast %20 : vector<8xf32> to vector<8x1xf32>
    %22 = vector.broadcast %21 : vector<8x1xf32> to vector<8x8xf32>
    %23 = arith.subf %16, %22 : vector<8x8xf32>
    %24 = math.exp %23 : vector<8x8xf32>
    %cst_14 = arith.constant dense<0.000000e+00> : vector<8xf32>
    %25 = vector.multi_reduction <add>, %24, %cst_14 [1] : vector<8x8xf32> to vector<8xf32>
    %26 = vector.shape_cast %25 : vector<8xf32> to vector<8x1xf32>
    %27 = tpu.reciprocal %26 {approx = true} : vector<8x1xf32> -> vector<8x1xf32>
    %28 = vector.broadcast %27 : vector<8x1xf32> to vector<8x8xf32>
    %29 = arith.mulf %24, %28 : vector<8x8xf32>
    %30 = arith.truncf %29 : vector<8x8xf32> to vector<8x8xbf16>
    %cst_15 = arith.constant dense<0.000000e+00> : vector<8x8xf32>
    %31 = tpu.matmul %30, %12, %cst_15 {dimension_numbers = #tpu.dot_dimension_numbers<[1], [0], [0], [1], [0, 0, 1, 1], [], []>} : vector<8x8xbf16>, vector<8x8xbf16>, vector<8x8xf32> -> vector<8x8xf32>
    %32 = vector.extract_strided_slice %4 {offsets = [0, 8], sizes = [8, 8], strides = [1, 1]} : vector<8x32xf32> to vector<8x8xf32>
    %33 = arith.truncf %32 : vector<8x8xf32> to vector<8x8xbf16>
    %34 = vector.extract_strided_slice %5 {offsets = [0, 8], sizes = [8, 8], strides = [1, 1]} : vector<8x32xf32> to vector<8x8xf32>
    %35 = arith.truncf %34 : vector<8x8xf32> to vector<8x8xbf16>
    %36 = vector.extract_strided_slice %6 {offsets = [0, 8], sizes = [8, 8], strides = [1, 1]} : vector<8x32xf32> to vector<8x8xf32>
    %37 = arith.truncf %36 : vector<8x8xf32> to vector<8x8xbf16>
    %cst_16 = arith.constant dense<0.000000e+00> : vector<8x8xf32>
    %38 = tpu.matmul %33, %35, %cst_16 {dimension_numbers = #tpu.dot_dimension_numbers<[1], [1], [0], [0], [0, 0, 1, 0], [], []>} : vector<8x8xbf16>, vector<8x8xbf16>, vector<8x8xf32> -> vector<8x8xf32>
    %c0_17 = arith.constant 0 : index
    %c1 = arith.constant 1 : index
    %c0_18 = arith.constant 0 : index
    %c0_19 = arith.constant 0 : index
    %39 = vector.load %arg4[%c0_17, %c1, %c0_18, %c0_19] : memref<1x4x8x8xf32, #tpu.memory_space<vmem>>, vector<1x1x8x8xf32>
    %40 = vector.shape_cast %39 : vector<1x1x8x8xf32> to vector<8x8xf32>
    %41 = arith.addf %38, %40 : vector<8x8xf32>
    %c0_20 = arith.constant 0 : index
    %c1_21 = arith.constant 1 : index
    %c0_22 = arith.constant 0 : index
    %c0_23 = arith.constant 0 : index
    %42 = vector.load %arg5[%c0_20, %c1_21, %c0_22, %c0_23] : memref<1x4x8x8xf32, #tpu.memory_space<vmem>>, vector<1x1x8x8xf32>
    %43 = vector.shape_cast %42 : vector<1x1x8x8xf32> to vector<8x8xf32>
    %44 = vector.shape_cast %41 : vector<8x8xf32> to vector<1x1x8x8xf32>
    tpu.vector_store %arg5[%c0_20, %c1_21, %c0_22, %c0_23], %44 {strides = array<i32>} : memref<1x4x8x8xf32, #tpu.memory_space<vmem>>, vector<1x1x8x8xf32>,
    %cst_24 = arith.constant dense<0xFF800000> : vector<8xf32>
    %45 = vector.multi_reduction <maximumf>, %41, %cst_24 [1] : vector<8x8xf32> to vector<8xf32>
    %46 = vector.shape_cast %45 : vector<8xf32> to vector<8x1xf32>
    %47 = vector.broadcast %46 : vector<8x1xf32> to vector<8x8xf32>
    %48 = arith.subf %41, %47 : vector<8x8xf32>
    %49 = math.exp %48 : vector<8x8xf32>
    %cst_25 = arith.constant dense<0.000000e+00> : vector<8xf32>
    %50 = vector.multi_reduction <add>, %49, %cst_25 [1] : vector<8x8xf32> to vector<8xf32>
    %51 = vector.shape_cast %50 : vector<8xf32> to vector<8x1xf32>
    %52 = tpu.reciprocal %51 {approx = true} : vector<8x1xf32> -> vector<8x1xf32>
    %53 = vector.broadcast %52 : vector<8x1xf32> to vector<8x8xf32>
    %54 = arith.mulf %49, %53 : vector<8x8xf32>
    %55 = arith.truncf %54 : vector<8x8xf32> to vector<8x8xbf16>
    %cst_26 = arith.constant dense<0.000000e+00> : vector<8x8xf32>
    %56 = tpu.matmul %55, %37, %cst_26 {dimension_numbers = #tpu.dot_dimension_numbers<[1], [0], [0], [1], [0, 0, 1, 1], [], []>} : vector<8x8xbf16>, vector<8x8xbf16>, vector<8x8xf32> -> vector<8x8xf32>
    %57 = vector.extract_strided_slice %4 {offsets = [0, 16], sizes = [8, 8], strides = [1, 1]} : vector<8x32xf32> to vector<8x8xf32>
    %58 = arith.truncf %57 : vector<8x8xf32> to vector<8x8xbf16>
    %59 = vector.extract_strided_slice %5 {offsets = [0, 16], sizes = [8, 8], strides = [1, 1]} : vector<8x32xf32> to vector<8x8xf32>
    %60 = arith.truncf %59 : vector<8x8xf32> to vector<8x8xbf16>
    %61 = vector.extract_strided_slice %6 {offsets = [0, 16], sizes = [8, 8], strides = [1, 1]} : vector<8x32xf32> to vector<8x8xf32>
    %62 = arith.truncf %61 : vector<8x8xf32> to vector<8x8xbf16>
    %cst_27 = arith.constant dense<0.000000e+00> : vector<8x8xf32>
    %63 = tpu.matmul %58, %60, %cst_27 {dimension_numbers = #tpu.dot_dimension_numbers<[1], [1], [0], [0], [0, 0, 1, 0], [], []>} : vector<8x8xbf16>, vector<8x8xbf16>, vector<8x8xf32> -> vector<8x8xf32>
    %c0_28 = arith.constant 0 : index
    %c2 = arith.constant 2 : index
    %c0_29 = arith.constant 0 : index
    %c0_30 = arith.constant 0 : index
    %64 = vector.load %arg4[%c0_28, %c2, %c0_29, %c0_30] : memref<1x4x8x8xf32, #tpu.memory_space<vmem>>, vector<1x1x8x8xf32>
    %65 = vector.shape_cast %64 : vector<1x1x8x8xf32> to vector<8x8xf32>
    %66 = arith.addf %63, %65 : vector<8x8xf32>
    %c0_31 = arith.constant 0 : index
    %c2_32 = arith.constant 2 : index
    %c0_33 = arith.constant 0 : index
    %c0_34 = arith.constant 0 : index
    %67 = vector.load %arg5[%c0_31, %c2_32, %c0_33, %c0_34] : memref<1x4x8x8xf32, #tpu.memory_space<vmem>>, vector<1x1x8x8xf32>
    %68 = vector.shape_cast %67 : vector<1x1x8x8xf32> to vector<8x8xf32>
    %69 = vector.shape_cast %66 : vector<8x8xf32> to vector<1x1x8x8xf32>
    tpu.vector_store %arg5[%c0_31, %c2_32, %c0_33, %c0_34], %69 {strides = array<i32>} : memref<1x4x8x8xf32, #tpu.memory_space<vmem>>, vector<1x1x8x8xf32>,
    %cst_35 = arith.constant dense<0xFF800000> : vector<8xf32>
    %70 = vector.multi_reduction <maximumf>, %66, %cst_35 [1] : vector<8x8xf32> to vector<8xf32>
    %71 = vector.shape_cast %70 : vector<8xf32> to vector<8x1xf32>
    %72 = vector.broadcast %71 : vector<8x1xf32> to vector<8x8xf32>
    %73 = arith.subf %66, %72 : vector<8x8xf32>
    %74 = math.exp %73 : vector<8x8xf32>
    %cst_36 = arith.constant dense<0.000000e+00> : vector<8xf32>
    %75 = vector.multi_reduction <add>, %74, %cst_36 [1] : vector<8x8xf32> to vector<8xf32>
    %76 = vector.shape_cast %75 : vector<8xf32> to vector<8x1xf32>
    %77 = tpu.reciprocal %76 {approx = true} : vector<8x1xf32> -> vector<8x1xf32>
    %78 = vector.broadcast %77 : vector<8x1xf32> to vector<8x8xf32>
    %79 = arith.mulf %74, %78 : vector<8x8xf32>
    %80 = arith.truncf %79 : vector<8x8xf32> to vector<8x8xbf16>
    %cst_37 = arith.constant dense<0.000000e+00> : vector<8x8xf32>
    %81 = tpu.matmul %80, %62, %cst_37 {dimension_numbers = #tpu.dot_dimension_numbers<[1], [0], [0], [1], [0, 0, 1, 1], [], []>} : vector<8x8xbf16>, vector<8x8xbf16>, vector<8x8xf32> -> vector<8x8xf32>
    %82 = vector.extract_strided_slice %4 {offsets = [0, 24], sizes = [8, 8], strides = [1, 1]} : vector<8x32xf32> to vector<8x8xf32>
    %83 = arith.truncf %82 : vector<8x8xf32> to vector<8x8xbf16>
    %84 = vector.extract_strided_slice %5 {offsets = [0, 24], sizes = [8, 8], strides = [1, 1]} : vector<8x32xf32> to vector<8x8xf32>
    %85 = arith.truncf %84 : vector<8x8xf32> to vector<8x8xbf16>
    %86 = vector.extract_strided_slice %6 {offsets = [0, 24], sizes = [8, 8], strides = [1, 1]} : vector<8x32xf32> to vector<8x8xf32>
    %87 = arith.truncf %86 : vector<8x8xf32> to vector<8x8xbf16>
    %cst_38 = arith.constant dense<0.000000e+00> : vector<8x8xf32>
    %88 = tpu.matmul %83, %85, %cst_38 {dimension_numbers = #tpu.dot_dimension_numbers<[1], [1], [0], [0], [0, 0, 1, 0], [], []>} : vector<8x8xbf16>, vector<8x8xbf16>, vector<8x8xf32> -> vector<8x8xf32>
    %c0_39 = arith.constant 0 : index
    %c3 = arith.constant 3 : index
    %c0_40 = arith.constant 0 : index
    %c0_41 = arith.constant 0 : index
    %89 = vector.load %arg4[%c0_39, %c3, %c0_40, %c0_41] : memref<1x4x8x8xf32, #tpu.memory_space<vmem>>, vector<1x1x8x8xf32>
    %90 = vector.shape_cast %89 : vector<1x1x8x8xf32> to vector<8x8xf32>
    %91 = arith.addf %88, %90 : vector<8x8xf32>
    %c0_42 = arith.constant 0 : index
    %c3_43 = arith.constant 3 : index
    %c0_44 = arith.constant 0 : index
    %c0_45 = arith.constant 0 : index
    %92 = vector.load %arg5[%c0_42, %c3_43, %c0_44, %c0_45] : memref<1x4x8x8xf32, #tpu.memory_space<vmem>>, vector<1x1x8x8xf32>
    %93 = vector.shape_cast %92 : vector<1x1x8x8xf32> to vector<8x8xf32>
    %94 = vector.shape_cast %91 : vector<8x8xf32> to vector<1x1x8x8xf32>
    tpu.vector_store %arg5[%c0_42, %c3_43, %c0_44, %c0_45], %94 {strides = array<i32>} : memref<1x4x8x8xf32, #tpu.memory_space<vmem>>, vector<1x1x8x8xf32>,
    %cst_46 = arith.constant dense<0xFF800000> : vector<8xf32>
    %95 = vector.multi_reduction <maximumf>, %91, %cst_46 [1] : vector<8x8xf32> to vector<8xf32>
    %96 = vector.shape_cast %95 : vector<8xf32> to vector<8x1xf32>
    %97 = vector.broadcast %96 : vector<8x1xf32> to vector<8x8xf32>
    %98 = arith.subf %91, %97 : vector<8x8xf32>
    %99 = math.exp %98 : vector<8x8xf32>
    %cst_47 = arith.constant dense<0.000000e+00> : vector<8xf32>
    %100 = vector.multi_reduction <add>, %99, %cst_47 [1] : vector<8x8xf32> to vector<8xf32>
    %101 = vector.shape_cast %100 : vector<8xf32> to vector<8x1xf32>
    %102 = tpu.reciprocal %101 {approx = true} : vector<8x1xf32> -> vector<8x1xf32>
    %103 = vector.broadcast %102 : vector<8x1xf32> to vector<8x8xf32>
    %104 = arith.mulf %99, %103 : vector<8x8xf32>
    %105 = arith.truncf %104 : vector<8x8xf32> to vector<8x8xbf16>
    %cst_48 = arith.constant dense<0.000000e+00> : vector<8x8xf32>
    %106 = tpu.matmul %105, %87, %cst_48 {dimension_numbers = #tpu.dot_dimension_numbers<[1], [0], [0], [1], [0, 0, 1, 1], [], []>} : vector<8x8xbf16>, vector<8x8xbf16>, vector<8x8xf32> -> vector<8x8xf32>
    %107 = tpu.concatenate %31, %56, %81, %106 in 1 : vector<8x8xf32>, vector<8x8xf32>, vector<8x8xf32>, vector<8x8xf32> -> vector<8x32xf32>
    %108 = arith.truncf %107 : vector<8x32xf32> to vector<8x32xbf16>
    %c0_49 = arith.constant 0 : index
    %c0_50 = arith.constant 0 : index
    %c0_51 = arith.constant 0 : index
    %109 = vector.load %arg6[%c0_49, %c0_50, %c0_51] : memref<1x8x32xbf16, #tpu.memory_space<vmem>>, vector<1x8x32xbf16>
    %110 = vector.shape_cast %109 : vector<1x8x32xbf16> to vector<8x32xbf16>
    %111 = vector.shape_cast %108 : vector<8x32xbf16> to vector<1x8x32xbf16>
    tpu.vector_store %arg6[%c0_49, %c0_50, %c0_51], %111 {strides = array<i32>} : memref<1x8x32xbf16, #tpu.memory_space<vmem>>, vector<1x8x32xbf16>,
    return
  }
  func.func @transform_0(%arg0: i32, %arg1: i32) -> (i32, i32, i32) {
    %c0_i32 = arith.constant 0 : i32
    %c0_i32_0 = arith.constant 0 : i32
    %c0_i32_1 = arith.constant 0 : i32
    return %arg1, %c0_i32, %c0_i32_0 : i32, i32, i32
  }
  func.func @transform_1(%arg0: i32, %arg1: i32) -> (i32, i32) {
    %c0_i32 = arith.constant 0 : i32
    %c0_i32_0 = arith.constant 0 : i32
    return %c0_i32, %arg0 : i32, i32
  }
  func.func @transform_2(%arg0: i32, %arg1: i32) -> (i32, i32, i32, i32) {
    %c0_i32 = arith.constant 0 : i32
    %c0_i32_0 = arith.constant 0 : i32
    %c0_i32_1 = arith.constant 0 : i32
    return %arg1, %arg0, %c0_i32, %c0_i32_0 : i32, i32, i32, i32
  }
  func.func @transform_3(%arg0: i32, %arg1: i32) -> (i32, i32, i32, i32) {
    %c0_i32 = arith.constant 0 : i32
    %c0_i32_0 = arith.constant 0 : i32
    %c0_i32_1 = arith.constant 0 : i32
    return %arg1, %arg0, %c0_i32, %c0_i32_0 : i32, i32, i32, i32
  }
  func.func @transform_4(%arg0: i32, %arg1: i32) -> (i32, i32, i32) {
    %c0_i32 = arith.constant 0 : i32
    %c0_i32_0 = arith.constant 0 : i32
    return %arg1, %c0_i32, %arg0 : i32, i32, i32
  }
}

</mosaic_0001>

<llo_original>
// kernel: tpu_custom_call.1
$region0: #{tpu_custom_call.1}
  #allocation0 [shape = 'u32[]', space=smem, size = 0x4, offset = 0x4, fixed_abs, tag = 'smem constant byte address 0x4 - core index']
  #allocation1 [shape = 'u32[144,128]{1,0:T(1,128)}', space=vmem, size = 0x12000, scoped, tag = 'internal scratch']
  %s0 = inlined_call_operand.hbm [shape: bf16[2,8,32], index: 0, kind: input, shape index: {}]
  %s1 = inlined_call_operand.hbm [shape: bf16[32,96], index: 1, kind: input, shape index: {}]
  %s2 = inlined_call_operand.hbm [shape: f32[2,4,8,8], index: 2, kind: input, shape index: {}]
  %s3 = inlined_call_operand.hbm [shape: f32[2,4,8,8], index: 3, kind: output, shape index: {0}]
  %s4 = inlined_call_operand.hbm [shape: bf16[2,8,32], index: 4, kind: output, shape index: {1}]
  %5 = xla_tuple %s3, %s4
  %s6 = sld [smem:[#allocation0]]
  $region65: #{tpu_custom_call.1} parent=0
    _
  %s8 = ssub.s32 1, %s6
  %s9 = scalar_select 0, %s8, %s6
  $region1: #{tpu_custom_call.1} parent=0
    #allocation2 [shape = 'u8[4096]{0}', space=vmem, size = 0x1000, scoped, tag = 'input window, operand 0']
    #allocation3 [shape = 's32[2]{0}', space=sflag, size = 0x8, scoped, tag = 'scoped memory for tpu_custom_call.1']
    #allocation4 [shape = 's32[2]{0}', space=sflag, size = 0x8, scoped, tag = 'scoped memory for tpu_custom_call.1']
    #allocation5 [shape = 'u8[8192]{0}', space=vmem, size = 0x2000, scoped, tag = 'input window, operand 1, single buffered']
    #allocation6 [shape = 's32[1]{0}', space=sflag, size = 0x4, scoped, tag = 'scoped memory for tpu_custom_call.1']
    #allocation7 [shape = 'u8[32768]{0}', space=vmem, size = 0x8000, scoped, tag = 'input window, operand 2']
    #allocation8 [shape = 'u8[32768]{0}', space=vmem, size = 0x8000, scoped, tag = 'output window, operand 0']
    #allocation9 [shape = 'u8[4096]{0}', space=vmem, size = 0x1000, scoped, tag = 'output window, operand 1']
    #allocation10 [shape = 's32[2]{0}', space=sflag, size = 0x8, scoped, tag = 'scoped memory for tpu_custom_call.1']
    %10 = vsyncpa [#allocation3], 0
    %s11 = scalar_lea.sflag [#allocation3], 1
    %12 = vsyncpa %s11, 0
    %13 = vsyncpa [#allocation6], 0
    %14 = vsyncpa [#allocation4], 0
    %s15 = scalar_lea.sflag [#allocation4], 1
    %16 = vsyncpa %s15, 0
    %17 = vsyncpa [#allocation10], 0
    %s18 = scalar_lea.sflag [#allocation10], 1
    %19 = vsyncpa %s18, 0
    loop: start=0, step=1, limit=4
    $region2: #{tpu_custom_call.1} parent=1 // loop_pre_header
      _
    $region3: #{tpu_custom_call.1} parent=1 // loop_header
      %s21 = sphi 0, %s25
      %p22 = scmp.ge.s32.totalorder %s21, 4
      %s28 = sphi 0, %s40
      %s29 = sphi 0, %s36
      %s30 = sphi 0, %s28
      %s31 = sphi 0, %s29
      %s32 = sphi 0, %s30
      %s33 = sphi 0, %s31
      %s43 = sphi 0, %s45
      %s46 = sphi 0, %s43
      %s47 = sphi 0, %s46
      %s63 = sphi 0, %s47
      %s69 = sphi 0, %s71
      %s72 = sphi 0, %s69
      %s73 = sphi 0, %s72
      %s89 = sphi 0, %s73
      %s97 = sphi 0, %s99
      %s100 = sphi 0, %s97
      %s101 = sphi 0, %s100
      %s117 = sphi 0, %s101
      %s125 = sphi 0, %s127
      %s128 = sphi 0, %s125
      %s129 = sphi 0, %s128
      %s145 = sphi 0, %s129
      %s153 = sphi 0, %s155
      %s156 = sphi 0, %s153
      %s157 = sphi 0, %s156
      %s173 = sphi 0, %s157
    $region4: #{tpu_custom_call.1} parent=1 // loop_header_branch
      %24 = sbr.rel (%p22) target = $region8
    $region5: #{tpu_custom_call.1} parent=1 // loop_body
      %s26 = ssub.s32 %s21, 1
      %s27 = ssub.s32 %s21, 2
      %s34 = sadd.s32 1, %s29
      %p35 = scmp.ge.s32.totalorder %s34, 2
      %s36 = scalar_select %p35, 0, %s34
      %s37 = sadd.s32 1, %s28
      %s38 = scalar_select %p35, %s37, %s28
      %p39 = scmp.ge.s32.totalorder %s38, 1
      %s40 = scalar_select %p39, 0, %s38
      %s41 = ssub.s32 %s29, %s36
      %p42 = scmp.eq.s32.totalorder %s41, 0
      %s44 = sadd.s32 %s43, 1
      %s45 = scalar_select %p42, %s43, %s44
      %p48 = pneg %p42
      %p49 = scmp.eq.s32.totalorder %s21, 1
      %p50 = por %p48, %p49
      %p51 = scmp.ne.s32.totalorder %s43, %s46
      %p52 = scmp.eq.s32.totalorder %s21, 0
      %p53 = por %p51, %p52
      %p54 = scmp.ne.s32.totalorder %s43, %s46
      %p55 = scmp.eq.s32.totalorder %s26, 1
      %p56 = por %p54, %p55
      %p57 = scmp.ne.s32.totalorder %s46, %s47
      %p58 = scmp.eq.s32.totalorder %s26, 0
      %p59 = por %p57, %p58
      %p60 = scmp.ne.s32.totalorder %s46, %s47
      %p61 = scmp.eq.s32.totalorder %s27, 1
      %p62 = por %p60, %p61
      %p64 = scmp.ne.s32.totalorder %s47, %s63
      %p65 = scmp.eq.s32.totalorder %s27, 0
      %p66 = por %p64, %p65
      %s67 = ssub.s32 %s28, %s40
      %p68 = scmp.eq.s32.totalorder %s67, 0
      %s70 = sadd.s32 %s69, 1
      %s71 = scalar_select %p68, %s69, %s70
      %p74 = pneg %p68
      %p75 = scmp.eq.s32.totalorder %s21, 1
      %p76 = por %p74, %p75
      %p77 = scmp.ne.s32.totalorder %s69, %s72
      %p78 = scmp.eq.s32.totalorder %s21, 0
      %p79 = por %p77, %p78
      %p80 = scmp.ne.s32.totalorder %s69, %s72
      %p81 = scmp.eq.s32.totalorder %s26, 1
      %p82 = por %p80, %p81
      %p83 = scmp.ne.s32.totalorder %s72, %s73
      %p84 = scmp.eq.s32.totalorder %s26, 0
      %p85 = por %p83, %p84
      %p86 = scmp.ne.s32.totalorder %s72, %s73
      %p87 = scmp.eq.s32.totalorder %s27, 1
      %p88 = por %p86, %p87
      %p90 = scmp.ne.s32.totalorder %s73, %s89
      %p91 = scmp.eq.s32.totalorder %s27, 0
      %p92 = por %p90, %p91
      %s93 = ssub.s32 %s29, %s36
      %s94 = ssub.s32 %s28, %s40
      %s95 = sor.u32 %s93, %s94
      %p96 = scmp.eq.s32.totalorder %s95, 0
      %s98 = sadd.s32 %s97, 1
      %s99 = scalar_select %p96, %s97, %s98
      %p102 = pneg %p96
      %p103 = scmp.eq.s32.totalorder %s21, 1
      %p104 = por %p102, %p103
      %p105 = scmp.ne.s32.totalorder %s97, %s100
      %p106 = scmp.eq.s32.totalorder %s21, 0
      %p107 = por %p105, %p106
      %p108 = scmp.ne.s32.totalorder %s97, %s100
      %p109 = scmp.eq.s32.totalorder %s26, 1
      %p110 = por %p108, %p109
      %p111 = scmp.ne.s32.totalorder %s100, %s101
      %p112 = scmp.eq.s32.totalorder %s26, 0
      %p113 = por %p111, %p112
      %p114 = scmp.ne.s32.totalorder %s100, %s101
      %p115 = scmp.eq.s32.totalorder %s27, 1
      %p116 = por %p114, %p115
      %p118 = scmp.ne.s32.totalorder %s101, %s117
      %p119 = scmp.eq.s32.totalorder %s27, 0
      %p120 = por %p118, %p119
      %s121 = ssub.s32 %s29, %s36
      %s122 = ssub.s32 %s28, %s40
      %s123 = sor.u32 %s121, %s122
      %p124 = scmp.eq.s32.totalorder %s123, 0
      %s126 = sadd.s32 %s125, 1
      %s127 = scalar_select %p124, %s125, %s126
      %p130 = pneg %p124
      %p131 = scmp.eq.s32.totalorder %s21, 1
      %p132 = por %p130, %p131
      %p133 = scmp.ne.s32.totalorder %s125, %s128
      %p134 = scmp.eq.s32.totalorder %s21, 0
      %p135 = por %p133, %p134
      %p136 = scmp.ne.s32.totalorder %s125, %s128
      %p137 = scmp.eq.s32.totalorder %s26, 1
      %p138 = por %p136, %p137
      %p139 = scmp.ne.s32.totalorder %s128, %s129
      %p140 = scmp.eq.s32.totalorder %s26, 0
      %p141 = por %p139, %p140
      %p142 = scmp.ne.s32.totalorder %s128, %s129
      %p143 = scmp.eq.s32.totalorder %s27, 1
      %p144 = por %p142, %p143
      %p146 = scmp.ne.s32.totalorder %s129, %s145
      %p147 = scmp.eq.s32.totalorder %s27, 0
      %p148 = por %p146, %p147
      %s149 = ssub.s32 %s29, %s36
      %s150 = ssub.s32 %s28, %s40
      %s151 = sor.u32 %s149, %s150
      %p152 = scmp.eq.s32.totalorder %s151, 0
      %s154 = sadd.s32 %s153, 1
      %s155 = scalar_select %p152, %s153, %s154
      %p158 = pneg %p152
      %p159 = scmp.eq.s32.totalorder %s21, 1
      %p160 = por %p158, %p159
      %p161 = scmp.ne.s32.totalorder %s153, %s156
      %p162 = scmp.eq.s32.totalorder %s21, 0
      %p163 = por %p161, %p162
      %p164 = scmp.ne.s32.totalorder %s153, %s156
      %p165 = scmp.eq.s32.totalorder %s26, 1
      %p166 = por %p164, %p165
      %p167 = scmp.ne.s32.totalorder %s156, %s157
      %p168 = scmp.eq.s32.totalorder %s26, 0
      %p169 = por %p167, %p168
      %p170 = scmp.ne.s32.totalorder %s156, %s157
      %p171 = scmp.eq.s32.totalorder %s27, 1
      %p172 = por %p170, %p171
      %p174 = scmp.ne.s32.totalorder %s157, %s173
      %p175 = scmp.eq.s32.totalorder %s27, 0
      %p176 = por %p174, %p175
      %p177 = scmp.le.s32.totalorder 1, %s21
      %p178 = scmp.lt.s32.totalorder %s21, 3
      %p179 = pnand %p177, %p178
      %p180 = pneg %p179
      // Predicated region
      $region9: #{tpu_custom_call.1} parent=5 // pred_check
        _
      $region10: #{tpu_custom_call.1} parent=5 // pred_check_branch
        %182 = sbr.rel (%p179) target = $region12
      $region11: #{tpu_custom_call.1} parent=5 // pred_region
        %s183 = ssub.s32 %s21, 1
        // Predicated region
        $region13: #{tpu_custom_call.1} parent=11 // pred_check
          %p184 = pneg %p85
        $region14: #{tpu_custom_call.1} parent=11 // pred_check_branch
          %186 = sbr.rel (%p184) target = $region16
        $region15: #{tpu_custom_call.1} parent=11 // pred_region
          %s188 = ssub.s32 256, 256
          %189 = vsyncadd [#allocation6], %s188
          %s190 = smul.addr %s30, 64
          %s191 = scalar_lea.hbm %s1, %s190
          %s192 = sshll.u32 [#allocation5], 4
          %s193 = int_to_ptr.vmem [resolvable:$true] %s192
          %198 = dma.hbm_to_vmem [thread:$0]  %s191, 256, %s193, [#allocation6], 64, 64, 4
        $region16: #{tpu_custom_call.1} parent=11 // pred_fallthru
          _
      $region12: #{tpu_custom_call.1} parent=5 // pred_fallthru
        _
      %p199 = scmp.lt.s32.totalorder %s21, 2
      // Predicated region
      $region17: #{tpu_custom_call.1} parent=5 // pred_check
        %p200 = pneg %p199
      $region18: #{tpu_custom_call.1} parent=5 // pred_check_branch
        %202 = sbr.rel (%p200) target = $region20
      $region19: #{tpu_custom_call.1} parent=5 // pred_region
        // Predicated region
        $region21: #{tpu_custom_call.1} parent=19 // pred_check
          %p203 = pneg %p53
        $region22: #{tpu_custom_call.1} parent=19 // pred_check_branch
          %205 = sbr.rel (%p203) target = $region24
        $region23: #{tpu_custom_call.1} parent=19 // pred_region
          %s206 = sand.u32 %s21, 1
          %s207 = scalar_lea.sflag [#allocation3], %s206
          %s208 = sand.u32 %s43, 1
          %s209 = smul.addr %s208, 4
          %s210 = scalar_lea.vmem [#allocation2], %s209
          %s212 = ssub.s32 64, 64
          %213 = vsyncadd %s207, %s212
          %s214 = smul.addr %s29, 64
          %s215 = scalar_lea.hbm %s0, %s214
          %s217 = sshll.u32 %s210, 4
          %s218 = int_to_ptr.vmem [resolvable:$true] %s217
          %220 = dma.hbm_to_vmem [thread:$0]  %s215, 64, %s218, %s207
        $region24: #{tpu_custom_call.1} parent=19 // pred_fallthru
          _
        // Predicated region
        $region25: #{tpu_custom_call.1} parent=19 // pred_check
          %p221 = pneg %p107
        $region26: #{tpu_custom_call.1} parent=19 // pred_check_branch
          %223 = sbr.rel (%p221) target = $region28
        $region27: #{tpu_custom_call.1} parent=19 // pred_region
          %s224 = sand.u32 %s21, 1
          %s225 = scalar_lea.sflag [#allocation3], %s224
          %s226 = sand.u32 %s97, 1
          %s227 = smul.addr %s226, 32
          %s228 = scalar_lea.vmem [#allocation7], %s227
          %s229 = smul.u32 4, %s28
          %s231 = ssub.s32 512, 512
          %232 = vsyncadd %s225, %s231
          %s233 = smul.addr %s29, 4
          %s234 = sadd.s32 %s229, %s233
          %s235 = smul.addr %s234, 128
          %s236 = scalar_lea.hbm %s2, %s235
          %s237 = sshll.u32 %s228, 4
          %s238 = int_to_ptr.vmem [resolvable:$true] %s237
          %243 = dma.hbm_to_vmem [thread:$0]  %s236, 512, %s238, %s225, 128, 128, 8
        $region28: #{tpu_custom_call.1} parent=19 // pred_fallthru
          _
      $region20: #{tpu_custom_call.1} parent=5 // pred_fallthru
        _
      %p244 = scmp.le.s32.totalorder 1, %s21
      %p245 = scmp.lt.s32.totalorder %s21, 3
      %p246 = pnand %p244, %p245
      %p247 = pneg %p246
      // Predicated region
      $region29: #{tpu_custom_call.1} parent=5 // pred_check
        _
      $region30: #{tpu_custom_call.1} parent=5 // pred_check_branch
        %249 = sbr.rel (%p246) target = $region32
      $region31: #{tpu_custom_call.1} parent=5 // pred_region
        %s250 = ssub.s32 %s21, 1
        %s251 = sand.u32 %s26, 1
        %s252 = scalar_lea.sflag [#allocation3], %s251
        %s253 = sand.u32 %s46, 1
        %s254 = smul.addr %s253, 4
        %s255 = scalar_lea.vmem [#allocation2], %s254
        // Predicated region
        $region33: #{tpu_custom_call.1} parent=31 // pred_check
          %p256 = pneg %p59
        $region34: #{tpu_custom_call.1} parent=31 // pred_check_branch
          %258 = sbr.rel (%p256) target = $region36
        $region35: #{tpu_custom_call.1} parent=31 // pred_region
          %259 = dma.done %s252, 64
        $region36: #{tpu_custom_call.1} parent=31 // pred_fallthru
          _
        // Predicated region
        $region37: #{tpu_custom_call.1} parent=31 // pred_check
          %p260 = pneg %p85
        $region38: #{tpu_custom_call.1} parent=31 // pred_check_branch
          %262 = sbr.rel (%p260) target = $region40
        $region39: #{tpu_custom_call.1} parent=31 // pred_region
          %263 = dma.done [#allocation6], 256
        $region40: #{tpu_custom_call.1} parent=31 // pred_fallthru
          _
        %s264 = sand.u32 %s26, 1
        %s265 = scalar_lea.sflag [#allocation3], %s264
        %s266 = sand.u32 %s100, 1
        %s267 = smul.addr %s266, 32
        %s268 = scalar_lea.vmem [#allocation7], %s267
        // Predicated region
        $region41: #{tpu_custom_call.1} parent=31 // pred_check
          %p269 = pneg %p113
        $region42: #{tpu_custom_call.1} parent=31 // pred_check_branch
          %271 = sbr.rel (%p269) target = $region44
        $region43: #{tpu_custom_call.1} parent=31 // pred_region
          %272 = dma.done %s265, 512
        $region44: #{tpu_custom_call.1} parent=31 // pred_fallthru
          _
        %s273 = sand.u32 %s26, 1
        %s274 = scalar_lea.sflag [#allocation3], %s273
        %s275 = sand.u32 %s46, 1
        %s276 = smul.addr %s275, 4
        %s277 = scalar_lea.vmem [#allocation2], %s276
        %p278 = pneg %p59
        %p279 = pneg %p56
        %p280 = pneg %p85
        %p281 = pneg %p82
        %s282 = sand.u32 %s26, 1
        %s283 = scalar_lea.sflag [#allocation3], %s282
        %s284 = sand.u32 %s100, 1
        %s285 = smul.addr %s284, 32
        %s286 = scalar_lea.vmem [#allocation7], %s285
        %p287 = pneg %p113
        %p288 = pneg %p110
        %p289 = pneg %p141
        %p290 = pneg %p138
        %s291 = sand.u32 %s128, 1
        %s292 = scalar_lea.sflag [#allocation4], %s291
        %s293 = sand.u32 %s128, 1
        %s294 = smul.addr %s293, 32
        %s295 = scalar_lea.vmem [#allocation8], %s294
        %p296 = pneg %p169
        %p297 = pneg %p166
        %s298 = sand.u32 %s156, 1
        %s299 = scalar_lea.sflag [#allocation10], %s298
        %s300 = sand.u32 %s156, 1
        %s301 = smul.addr %s300, 4
        %s302 = scalar_lea.vmem [#allocation9], %s301
        %s303 = smul.u32 4, %s30
        %s304 = smul.u32 4, %s30
        %v306 = vld [vmem:[%s255] sm:$0xf]
        %v307 = vld [vmem:[#allocation5] sm:$0xf]
        %v308 = vld [vmem:[#allocation5 + $0x4] sm:$0xf]
        %v309 = vld [vmem:[#allocation5 + $0x8] sm:$0xf]
        %v310 = vld [vmem:[#allocation5 + $0xc] sm:$0xf]
        %v315 = vunpack.c.l.b16 %v307
        %v316 = vunpack.c.l.b16 %v308
        %v317 = vunpack.c.l.b16 %v309
        %v318 = vunpack.c.l.b16 %v310
        %v319 = vpack.c.b16 %v316, %v315
        %v320 = vpack.c.b16 %v318, %v317
        %vm323 = vcmask 261120
        %v325 = vsel %vm323, %v306, 0
        %327 = vmatprep.subr.bf16.mxu0 0
        %328 = vmatpush1.bf16.msra.mxu0 0
        %329 = vmatprep.subr.bf16.mxu0 0
        %330 = vmatpush1.bf16.msra.mxu0 0
        %331 = vmatprep.subr.bf16.mxu0 0
        %332 = vmatpush1.bf16.msra.mxu0 0
        %333 = vmatprep.subr.bf16.mxu0 0
        %334 = vmatpush1.bf16.msra.mxu0 0
        %335 = vmatprep.subr.bf16.mxu0 0
        %336 = vmatpush1.bf16.msra.mxu0 0
        %337 = vmatprep.subr.bf16.mxu0 0
        %338 = vmatpush1.bf16.msra.mxu0 0
        %339 = vmatprep.subr.bf16.mxu0 0
        %340 = vmatpush1.bf16.msra.mxu0 %v320
        %341 = vmatprep.subr.bf16.mxu0 0
        %342 = vmatpush1.bf16.msra.mxu0 %v319
        %343 = vmatprep.subr.bf16.mxu0 0
        %344 = vmatpush2.bf16.msra.mxu0 0
        %345 = vmatprep.subr.bf16.mxu0 0
        %346 = vmatpush2.bf16.msra.mxu0 0
        %347 = vmatprep.subr.bf16.mxu0 0
        %348 = vmatpush2.bf16.msra.mxu0 0
        %349 = vmatprep.subr.bf16.mxu0 0
        %350 = vmatpush2.bf16.msra.mxu0 0
        %351 = vmatprep.subr.bf16.mxu0 0
        %352 = vmatpush2.bf16.msra.mxu0 0
        %353 = vmatprep.subr.bf16.mxu0 0
        %354 = vmatpush2.bf16.msra.mxu0 0
        %355 = vmatprep.subr.bf16.mxu0 0
        %356 = vmatpush2.bf16.msra.mxu0 0
        %357 = vmatprep.subr.bf16.mxu0 0
        %358 = vmatpush2.bf16.msra.mxu0 0
        %359 = vmatprep.mubr.bf16.mxu0 0
        %360 = vmatmul.mubr.bf16.gmra.mxu0 %v325
        %v361 = vpop.f32.mrf.mxu0
        %v362 = vadd.f32 0.0, %v361
        %v363 = vpop.f32.mrf.mxu0
        %v364 = vpop.f32.mrf.mxu0
        %v365 = vpop.f32.mrf.mxu0
        %366 = vdwg.mxu0
        %v367 = vpack.c.bf16 %v362, %v362
        %v368 = vld [vmem:[%s268] sm:$0xff]
        %370 = vrot.lane.b32.xlu0 %v367, 96
        %v371 = vpop.permute.xlu0 %370
        %vm372 = vcmask 64512
        %v374 = vsel %vm372, %v367, 0
        %v377 = vsel %vm372, %v371, 0
        %379 = vmatprep.subr.bf16.mxu0 0
        %380 = vmatpush1.bf16.xpose.msra.mxu0 0
        %381 = vmatprep.subr.bf16.mxu0 0
        %382 = vmatpush1.bf16.xpose.msra.mxu0 0
        %383 = vmatprep.subr.bf16.mxu0 0
        %384 = vmatpush1.bf16.xpose.msra.mxu0 0
        %385 = vmatprep.subr.bf16.mxu0 0
        %386 = vmatpush1.bf16.xpose.msra.mxu0 0
        %387 = vmatprep.subr.bf16.mxu0 0
        %388 = vmatpush1.bf16.xpose.msra.mxu0 0
        %389 = vmatprep.subr.bf16.mxu0 0
        %390 = vmatpush1.bf16.xpose.msra.mxu0 0
        %391 = vmatprep.subr.bf16.mxu0 0
        %392 = vmatpush1.bf16.xpose.msra.mxu0 0
        %393 = vmatprep.subr.bf16.mxu0 0
        %394 = vmatpush1.bf16.xpose.msra.mxu0 %v377
        %395 = vmatprep.subr.bf16.mxu0 0
        %396 = vmatpush2.bf16.xpose.msra.mxu0 0
        %397 = vmatprep.subr.bf16.mxu0 0
        %398 = vmatpush2.bf16.xpose.msra.mxu0 0
        %399 = vmatprep.subr.bf16.mxu0 0
        %400 = vmatpush2.bf16.xpose.msra.mxu0 0
        %401 = vmatprep.subr.bf16.mxu0 0
        %402 = vmatpush2.bf16.xpose.msra.mxu0 0
        %403 = vmatprep.subr.bf16.mxu0 0
        %404 = vmatpush2.bf16.xpose.msra.mxu0 0
        %405 = vmatprep.subr.bf16.mxu0 0
        %406 = vmatpush2.bf16.xpose.msra.mxu0 0
        %407 = vmatprep.subr.bf16.mxu0 0
        %408 = vmatpush2.bf16.xpose.msra.mxu0 0
        %409 = vmatprep.subr.bf16.mxu0 0
        %410 = vmatpush2.bf16.xpose.msra.mxu0 0
        %411 = vmatprep.mubr.bf16.mxu0 0
        %412 = vmatmul.mubr.bf16.gmra.mxu0 %v374
        %v413 = vpop.f32.mrf.mxu0
        %v414 = vadd.f32 %v368, %v413
        %v415 = vpop.f32.mrf.mxu0
        %v416 = vpop.f32.mrf.mxu0
        %v417 = vpop.f32.mrf.mxu0
        %418 = vdwg.mxu0
        %419 = vst.msk [vmem:[%s295] sm:$0xff] %vm372, %v414
        %v420 = vsel %vm372, %v414, -inf
        %421 = vmax.xlane.f32.xlu0 %v420
        %v422 = vpop.xlane.xlu0 %421
        %v423 = vsub.f32 %v414, %v422
        %v424 = vmul.f32 %v423, 1.442695
        %v425 = vpow.pop %v424
        %v426 = vsel %vm372, %v425, 0.0
        %427 = vadd.xlane.f32.xlu0 %v426
        %v428 = vpop.xlane.xlu0 %427
        %v429 = vrcp.pop %v428
        %v430 = vmul.f32 %v425, %v429
        %v431 = vpack.c.bf16 %v430, %v430
        %432 = vrot.lane.b32.xlu0 %v367, 64
        %v433 = vpop.permute.xlu0 %432
        %v435 = vsel %vm372, %v431, 0
        %vm437 = vcmask 1043456
        %v439 = vsel %vm437, %v433, 0
        %441 = vmatprep.subr.bf16.mxu0 0
        %442 = vmatpush1.bf16.msra.mxu0 0
        %443 = vmatprep.subr.bf16.mxu0 0
        %444 = vmatpush1.bf16.msra.mxu0 0
        %445 = vmatprep.subr.bf16.mxu0 0
        %446 = vmatpush1.bf16.msra.mxu0 0
        %447 = vmatprep.subr.bf16.mxu0 0
        %448 = vmatpush1.bf16.msra.mxu0 0
        %449 = vmatprep.subr.bf16.mxu0 0
        %450 = vmatpush1.bf16.msra.mxu0 0
        %451 = vmatprep.subr.bf16.mxu0 0
        %452 = vmatpush1.bf16.msra.mxu0 0
        %453 = vmatprep.subr.bf16.mxu0 0
        %454 = vmatpush1.bf16.msra.mxu0 0
        %455 = vmatprep.subr.bf16.mxu0 0
        %456 = vmatpush1.bf16.msra.mxu0 %v439
        %457 = vmatprep.subr.bf16.mxu0 0
        %458 = vmatpush2.bf16.msra.mxu0 0
        %459 = vmatprep.subr.bf16.mxu0 0
        %460 = vmatpush2.bf16.msra.mxu0 0
        %461 = vmatprep.subr.bf16.mxu0 0
        %462 = vmatpush2.bf16.msra.mxu0 0
        %463 = vmatprep.subr.bf16.mxu0 0
        %464 = vmatpush2.bf16.msra.mxu0 0
        %465 = vmatprep.subr.bf16.mxu0 0
        %466 = vmatpush2.bf16.msra.mxu0 0
        %467 = vmatprep.subr.bf16.mxu0 0
        %468 = vmatpush2.bf16.msra.mxu0 0
        %469 = vmatprep.subr.bf16.mxu0 0
        %470 = vmatpush2.bf16.msra.mxu0 0
        %471 = vmatprep.subr.bf16.mxu0 0
        %472 = vmatpush2.bf16.msra.mxu0 0
        %473 = vmatprep.mubr.bf16.mxu0 0
        %474 = vmatmul.mubr.bf16.gmra.mxu0 %v435
        %v475 = vpop.f32.mrf.mxu0
        %v476 = vadd.f32 0.0, %v475
        %v477 = vpop.f32.mrf.mxu0
        %v478 = vpop.f32.mrf.mxu0
        %v479 = vpop.f32.mrf.mxu0
        %480 = vdwg.mxu0
        %s481 = scalar_lea.vmem %s268, 8 [#allocation7]
        %v482 = vld [vmem:[%s481] sm:$0xff]
        %483 = vrot.lane.b32.xlu0 %v367, 120
        %v484 = vpop.permute.xlu0 %483
        %485 = vrot.lane.b32.xlu0 %v367, 88
        %v486 = vpop.permute.xlu0 %485
        %v488 = vsel %vm372, %v484, 0
        %v491 = vsel %vm372, %v486, 0
        %493 = vmatprep.subr.bf16.mxu0 0
        %494 = vmatpush1.bf16.xpose.msra.mxu0 0
        %495 = vmatprep.subr.bf16.mxu0 0
        %496 = vmatpush1.bf16.xpose.msra.mxu0 0
        %497 = vmatprep.subr.bf16.mxu0 0
        %498 = vmatpush1.bf16.xpose.msra.mxu0 0
        %499 = vmatprep.subr.bf16.mxu0 0
        %500 = vmatpush1.bf16.xpose.msra.mxu0 0
        %501 = vmatprep.subr.bf16.mxu0 0
        %502 = vmatpush1.bf16.xpose.msra.mxu0 0
        %503 = vmatprep.subr.bf16.mxu0 0
        %504 = vmatpush1.bf16.xpose.msra.mxu0 0
        %505 = vmatprep.subr.bf16.mxu0 0
        %506 = vmatpush1.bf16.xpose.msra.mxu0 0
        %507 = vmatprep.subr.bf16.mxu0 0
        %508 = vmatpush1.bf16.xpose.msra.mxu0 %v491
        %509 = vmatprep.subr.bf16.mxu0 0
        %510 = vmatpush2.bf16.xpose.msra.mxu0 0
        %511 = vmatprep.subr.bf16.mxu0 0
        %512 = vmatpush2.bf16.xpose.msra.mxu0 0
        %513 = vmatprep.subr.bf16.mxu0 0
        %514 = vmatpush2.bf16.xpose.msra.mxu0 0
        %515 = vmatprep.subr.bf16.mxu0 0
        %516 = vmatpush2.bf16.xpose.msra.mxu0 0
        %517 = vmatprep.subr.bf16.mxu0 0
        %518 = vmatpush2.bf16.xpose.msra.mxu0 0
        %519 = vmatprep.subr.bf16.mxu0 0
        %520 = vmatpush2.bf16.xpose.msra.mxu0 0
        %521 = vmatprep.subr.bf16.mxu0 0
        %522 = vmatpush2.bf16.xpose.msra.mxu0 0
        %523 = vmatprep.subr.bf16.mxu0 0
        %524 = vmatpush2.bf16.xpose.msra.mxu0 0
        %525 = vmatprep.mubr.bf16.mxu0 0
        %526 = vmatmul.mubr.bf16.gmra.mxu0 %v488
        %v527 = vpop.f32.mrf.mxu0
        %v528 = vadd.f32 %v482, %v527
        %v529 = vpop.f32.mrf.mxu0
        %v530 = vpop.f32.mrf.mxu0
        %v531 = vpop.f32.mrf.mxu0
        %532 = vdwg.mxu0
        %s533 = scalar_lea.vmem %s295, 8 [#allocation8]
        %534 = vst.msk [vmem:[%s533] sm:$0xff] %vm372, %v528
        %v535 = vsel %vm372, %v528, -inf
        %536 = vmax.xlane.f32.xlu0 %v535
        %v537 = vpop.xlane.xlu0 %536
        %v538 = vsub.f32 %v528, %v537
        %v539 = vmul.f32 %v538, 1.442695
        %v540 = vpow.pop %v539
        %v541 = vsel %vm372, %v540, 0.0
        %542 = vadd.xlane.f32.xlu0 %v541
        %v543 = vpop.xlane.xlu0 %542
        %v544 = vrcp.pop %v543
        %v545 = vmul.f32 %v540, %v544
        %v546 = vpack.c.bf16 %v545, %v545
        %547 = vrot.lane.b32.xlu0 %v367, 56
        %v548 = vpop.permute.xlu0 %547
        %v550 = vsel %vm372, %v546, 0
        %v553 = vsel %vm437, %v548, 0
        %555 = vmatprep.subr.bf16.mxu0 0
        %556 = vmatpush1.bf16.msra.mxu0 0
        %557 = vmatprep.subr.bf16.mxu0 0
        %558 = vmatpush1.bf16.msra.mxu0 0
        %559 = vmatprep.subr.bf16.mxu0 0
        %560 = vmatpush1.bf16.msra.mxu0 0
        %561 = vmatprep.subr.bf16.mxu0 0
        %562 = vmatpush1.bf16.msra.mxu0 0
        %563 = vmatprep.subr.bf16.mxu0 0
        %564 = vmatpush1.bf16.msra.mxu0 0
        %565 = vmatprep.subr.bf16.mxu0 0
        %566 = vmatpush1.bf16.msra.mxu0 0
        %567 = vmatprep.subr.bf16.mxu0 0
        %568 = vmatpush1.bf16.msra.mxu0 0
        %569 = vmatprep.subr.bf16.mxu0 0
        %570 = vmatpush1.bf16.msra.mxu0 %v553
        %571 = vmatprep.subr.bf16.mxu0 0
        %572 = vmatpush2.bf16.msra.mxu0 0
        %573 = vmatprep.subr.bf16.mxu0 0
        %574 = vmatpush2.bf16.msra.mxu0 0
        %575 = vmatprep.subr.bf16.mxu0 0
        %576 = vmatpush2.bf16.msra.mxu0 0
        %577 = vmatprep.subr.bf16.mxu0 0
        %578 = vmatpush2.bf16.msra.mxu0 0
        %579 = vmatprep.subr.bf16.mxu0 0
        %580 = vmatpush2.bf16.msra.mxu0 0
        %581 = vmatprep.subr.bf16.mxu0 0
        %582 = vmatpush2.bf16.msra.mxu0 0
        %583 = vmatprep.subr.bf16.mxu0 0
        %584 = vmatpush2.bf16.msra.mxu0 0
        %585 = vmatprep.subr.bf16.mxu0 0
        %586 = vmatpush2.bf16.msra.mxu0 0
        %587 = vmatprep.mubr.bf16.mxu0 0
        %588 = vmatmul.mubr.bf16.gmra.mxu0 %v550
        %v589 = vpop.f32.mrf.mxu0
        %v590 = vadd.f32 0.0, %v589
        %v591 = vpop.f32.mrf.mxu0
        %v592 = vpop.f32.mrf.mxu0
        %v593 = vpop.f32.mrf.mxu0
        %594 = vdwg.mxu0
        %s595 = scalar_lea.vmem %s268, 16 [#allocation7]
        %v596 = vld [vmem:[%s595] sm:$0xff]
        %597 = vrot.lane.b32.xlu0 %v367, 112
        %v598 = vpop.permute.xlu0 %597
        %599 = vrot.lane.b32.xlu0 %v367, 80
        %v600 = vpop.permute.xlu0 %599
        %v602 = vsel %vm372, %v598, 0
        %v605 = vsel %vm372, %v600, 0
        %607 = vmatprep.subr.bf16.mxu0 0
        %608 = vmatpush1.bf16.xpose.msra.mxu0 0
        %609 = vmatprep.subr.bf16.mxu0 0
        %610 = vmatpush1.bf16.xpose.msra.mxu0 0
        %611 = vmatprep.subr.bf16.mxu0 0
        %612 = vmatpush1.bf16.xpose.msra.mxu0 0
        %613 = vmatprep.subr.bf16.mxu0 0
        %614 = vmatpush1.bf16.xpose.msra.mxu0 0
        %615 = vmatprep.subr.bf16.mxu0 0
        %616 = vmatpush1.bf16.xpose.msra.mxu0 0
        %617 = vmatprep.subr.bf16.mxu0 0
        %618 = vmatpush1.bf16.xpose.msra.mxu0 0
        %619 = vmatprep.subr.bf16.mxu0 0
        %620 = vmatpush1.bf16.xpose.msra.mxu0 0
        %621 = vmatprep.subr.bf16.mxu0 0
        %622 = vmatpush1.bf16.xpose.msra.mxu0 %v605
        %623 = vmatprep.subr.bf16.mxu0 0
        %624 = vmatpush2.bf16.xpose.msra.mxu0 0
        %625 = vmatprep.subr.bf16.mxu0 0
        %626 = vmatpush2.bf16.xpose.msra.mxu0 0
        %627 = vmatprep.subr.bf16.mxu0 0
        %628 = vmatpush2.bf16.xpose.msra.mxu0 0
        %629 = vmatprep.subr.bf16.mxu0 0
        %630 = vmatpush2.bf16.xpose.msra.mxu0 0
        %631 = vmatprep.subr.bf16.mxu0 0
        %632 = vmatpush2.bf16.xpose.msra.mxu0 0
        %633 = vmatprep.subr.bf16.mxu0 0
        %634 = vmatpush2.bf16.xpose.msra.mxu0 0
        %635 = vmatprep.subr.bf16.mxu0 0
        %636 = vmatpush2.bf16.xpose.msra.mxu0 0
        %637 = vmatprep.subr.bf16.mxu0 0
        %638 = vmatpush2.bf16.xpose.msra.mxu0 0
        %639 = vmatprep.mubr.bf16.mxu0 0
        %640 = vmatmul.mubr.bf16.gmra.mxu0 %v602
        %v641 = vpop.f32.mrf.mxu0
        %v642 = vadd.f32 %v596, %v641
        %v643 = vpop.f32.mrf.mxu0
        %v644 = vpop.f32.mrf.mxu0
        %v645 = vpop.f32.mrf.mxu0
        %646 = vdwg.mxu0
        %s647 = scalar_lea.vmem %s295, 16 [#allocation8]
        %648 = vst.msk [vmem:[%s647] sm:$0xff] %vm372, %v642
        %v649 = vsel %vm372, %v642, -inf
        %650 = vmax.xlane.f32.xlu0 %v649
        %v651 = vpop.xlane.xlu0 %650
        %v652 = vsub.f32 %v642, %v651
        %v653 = vmul.f32 %v652, 1.442695
        %v654 = vpow.pop %v653
        %v655 = vsel %vm372, %v654, 0.0
        %656 = vadd.xlane.f32.xlu0 %v655
        %v657 = vpop.xlane.xlu0 %656
        %v658 = vrcp.pop %v657
        %v659 = vmul.f32 %v654, %v658
        %v660 = vpack.c.bf16 %v659, %v659
        %661 = vrot.lane.b32.xlu0 %v367, 48
        %v662 = vpop.permute.xlu0 %661
        %v664 = vsel %vm372, %v660, 0
        %v667 = vsel %vm437, %v662, 0
        %669 = vmatprep.subr.bf16.mxu0 0
        %670 = vmatpush1.bf16.msra.mxu0 0
        %671 = vmatprep.subr.bf16.mxu0 0
        %672 = vmatpush1.bf16.msra.mxu0 0
        %673 = vmatprep.subr.bf16.mxu0 0
        %674 = vmatpush1.bf16.msra.mxu0 0
        %675 = vmatprep.subr.bf16.mxu0 0
        %676 = vmatpush1.bf16.msra.mxu0 0
        %677 = vmatprep.subr.bf16.mxu0 0
        %678 = vmatpush1.bf16.msra.mxu0 0
        %679 = vmatprep.subr.bf16.mxu0 0
        %680 = vmatpush1.bf16.msra.mxu0 0
        %681 = vmatprep.subr.bf16.mxu0 0
        %682 = vmatpush1.bf16.msra.mxu0 0
        %683 = vmatprep.subr.bf16.mxu0 0
        %684 = vmatpush1.bf16.msra.mxu0 %v667
        %685 = vmatprep.subr.bf16.mxu0 0
        %686 = vmatpush2.bf16.msra.mxu0 0
        %687 = vmatprep.subr.bf16.mxu0 0
        %688 = vmatpush2.bf16.msra.mxu0 0
        %689 = vmatprep.subr.bf16.mxu0 0
        %690 = vmatpush2.bf16.msra.mxu0 0
        %691 = vmatprep.subr.bf16.mxu0 0
        %692 = vmatpush2.bf16.msra.mxu0 0
        %693 = vmatprep.subr.bf16.mxu0 0
        %694 = vmatpush2.bf16.msra.mxu0 0
        %695 = vmatprep.subr.bf16.mxu0 0
        %696 = vmatpush2.bf16.msra.mxu0 0
        %697 = vmatprep.subr.bf16.mxu0 0
        %698 = vmatpush2.bf16.msra.mxu0 0
        %699 = vmatprep.subr.bf16.mxu0 0
        %700 = vmatpush2.bf16.msra.mxu0 0
        %701 = vmatprep.mubr.bf16.mxu0 0
        %702 = vmatmul.mubr.bf16.gmra.mxu0 %v664
        %v703 = vpop.f32.mrf.mxu0
        %v704 = vadd.f32 0.0, %v703
        %v705 = vpop.f32.mrf.mxu0
        %v706 = vpop.f32.mrf.mxu0
        %v707 = vpop.f32.mrf.mxu0
        %708 = vdwg.mxu0
        %s709 = scalar_lea.vmem %s268, 24 [#allocation7]
        %v710 = vld [vmem:[%s709] sm:$0xff]
        %711 = vrot.lane.b32.xlu0 %v367, 104
        %v712 = vpop.permute.xlu0 %711
        %713 = vrot.lane.b32.xlu0 %v367, 72
        %v714 = vpop.permute.xlu0 %713
        %v716 = vsel %vm372, %v712, 0
        %v719 = vsel %vm372, %v714, 0
        %721 = vmatprep.subr.bf16.mxu0 0
        %722 = vmatpush1.bf16.xpose.msra.mxu0 0
        %723 = vmatprep.subr.bf16.mxu0 0
        %724 = vmatpush1.bf16.xpose.msra.mxu0 0
        %725 = vmatprep.subr.bf16.mxu0 0
        %726 = vmatpush1.bf16.xpose.msra.mxu0 0
        %727 = vmatprep.subr.bf16.mxu0 0
        %728 = vmatpush1.bf16.xpose.msra.mxu0 0
        %729 = vmatprep.subr.bf16.mxu0 0
        %730 = vmatpush1.bf16.xpose.msra.mxu0 0
        %731 = vmatprep.subr.bf16.mxu0 0
        %732 = vmatpush1.bf16.xpose.msra.mxu0 0
        %733 = vmatprep.subr.bf16.mxu0 0
        %734 = vmatpush1.bf16.xpose.msra.mxu0 0
        %735 = vmatprep.subr.bf16.mxu0 0
        %736 = vmatpush1.bf16.xpose.msra.mxu0 %v719
        %737 = vmatprep.subr.bf16.mxu0 0
        %738 = vmatpush2.bf16.xpose.msra.mxu0 0
        %739 = vmatprep.subr.bf16.mxu0 0
        %740 = vmatpush2.bf16.xpose.msra.mxu0 0
        %741 = vmatprep.subr.bf16.mxu0 0
        %742 = vmatpush2.bf16.xpose.msra.mxu0 0
        %743 = vmatprep.subr.bf16.mxu0 0
        %744 = vmatpush2.bf16.xpose.msra.mxu0 0
        %745 = vmatprep.subr.bf16.mxu0 0
        %746 = vmatpush2.bf16.xpose.msra.mxu0 0
        %747 = vmatprep.subr.bf16.mxu0 0
        %748 = vmatpush2.bf16.xpose.msra.mxu0 0
        %749 = vmatprep.subr.bf16.mxu0 0
        %750 = vmatpush2.bf16.xpose.msra.mxu0 0
        %751 = vmatprep.subr.bf16.mxu0 0
        %752 = vmatpush2.bf16.xpose.msra.mxu0 0
        %753 = vmatprep.mubr.bf16.mxu0 0
        %754 = vmatmul.mubr.bf16.gmra.mxu0 %v716
        %v755 = vpop.f32.mrf.mxu0
        %v756 = vadd.f32 %v710, %v755
        %v757 = vpop.f32.mrf.mxu0
        %v758 = vpop.f32.mrf.mxu0
        %v759 = vpop.f32.mrf.mxu0
        %760 = vdwg.mxu0
        %s761 = scalar_lea.vmem %s295, 24 [#allocation8]
        %762 = vst.msk [vmem:[%s761] sm:$0xff] %vm372, %v756
        %v763 = vsel %vm372, %v756, -inf
        %764 = vmax.xlane.f32.xlu0 %v763
        %v765 = vpop.xlane.xlu0 %764
        %v766 = vsub.f32 %v756, %v765
        %v767 = vmul.f32 %v766, 1.442695
        %v768 = vpow.pop %v767
        %v769 = vsel %vm372, %v768, 0.0
        %770 = vadd.xlane.f32.xlu0 %v769
        %v771 = vpop.xlane.xlu0 %770
        %v772 = vrcp.pop %v771
        %v773 = vmul.f32 %v768, %v772
        %v774 = vpack.c.bf16 %v773, %v773
        %775 = vrot.lane.b32.xlu0 %v367, 40
        %v776 = vpop.permute.xlu0 %775
        %v778 = vsel %vm372, %v774, 0
        %v781 = vsel %vm437, %v776, 0
        %783 = vmatprep.subr.bf16.mxu0 0
        %784 = vmatpush1.bf16.msra.mxu0 0
        %785 = vmatprep.subr.bf16.mxu0 0
        %786 = vmatpush1.bf16.msra.mxu0 0
        %787 = vmatprep.subr.bf16.mxu0 0
        %788 = vmatpush1.bf16.msra.mxu0 0
        %789 = vmatprep.subr.bf16.mxu0 0
        %790 = vmatpush1.bf16.msra.mxu0 0
        %791 = vmatprep.subr.bf16.mxu0 0
        %792 = vmatpush1.bf16.msra.mxu0 0
        %793 = vmatprep.subr.bf16.mxu0 0
        %794 = vmatpush1.bf16.msra.mxu0 0
        %795 = vmatprep.subr.bf16.mxu0 0
        %796 = vmatpush1.bf16.msra.mxu0 0
        %797 = vmatprep.subr.bf16.mxu0 0
        %798 = vmatpush1.bf16.msra.mxu0 %v781
        %799 = vmatprep.subr.bf16.mxu0 0
        %800 = vmatpush2.bf16.msra.mxu0 0
        %801 = vmatprep.subr.bf16.mxu0 0
        %802 = vmatpush2.bf16.msra.mxu0 0
        %803 = vmatprep.subr.bf16.mxu0 0
        %804 = vmatpush2.bf16.msra.mxu0 0
        %805 = vmatprep.subr.bf16.mxu0 0
        %806 = vmatpush2.bf16.msra.mxu0 0
        %807 = vmatprep.subr.bf16.mxu0 0
        %808 = vmatpush2.bf16.msra.mxu0 0
        %809 = vmatprep.subr.bf16.mxu0 0
        %810 = vmatpush2.bf16.msra.mxu0 0
        %811 = vmatprep.subr.bf16.mxu0 0
        %812 = vmatpush2.bf16.msra.mxu0 0
        %813 = vmatprep.subr.bf16.mxu0 0
        %814 = vmatpush2.bf16.msra.mxu0 0
        %815 = vmatprep.mubr.bf16.mxu0 0
        %816 = vmatmul.mubr.bf16.gmra.mxu0 %v778
        %v817 = vpop.f32.mrf.mxu0
        %v818 = vadd.f32 0.0, %v817
        %v819 = vpop.f32.mrf.mxu0
        %v820 = vpop.f32.mrf.mxu0
        %v821 = vpop.f32.mrf.mxu0
        %822 = vdwg.mxu0
        %824 = vrot.lane.b32.xlu0 %v590, 8
        %v825 = vpop.permute.xlu0 %824
        %828 = vrot.lane.b32.xlu0 %v704, 16
        %v829 = vpop.permute.xlu0 %828
        %832 = vrot.lane.b32.xlu0 %v818, 24
        %v833 = vpop.permute.xlu0 %832
        %v835 = vsel %vm372, %v476, %v825
        %vm836 = vcmask 130048
        %v837 = vsel %vm836, %v835, %v829
        %vm838 = vcmask 195584
        %v839 = vsel %vm838, %v837, %v833
        %v840 = vpack.c.bf16 %v839, %v839
        %vm841 = vcmask 257024
        %842 = vst.msk [vmem:[%s302] sm:$0xf] %vm841, %v840
        %s843 = sand.u32 %s128, 1
        %s844 = scalar_lea.sflag [#allocation4], %s843
        %s845 = sand.u32 %s128, 1
        %s846 = smul.addr %s845, 32
        %s847 = scalar_lea.vmem [#allocation8], %s846
        %s848 = sand.u32 %s156, 1
        %s849 = scalar_lea.sflag [#allocation10], %s848
        %s850 = sand.u32 %s156, 1
        %s851 = smul.addr %s850, 4
        %s852 = scalar_lea.vmem [#allocation9], %s851
        // Predicated region
        $region45: #{tpu_custom_call.1} parent=31 // pred_check
          %p853 = pneg %p138
        $region46: #{tpu_custom_call.1} parent=31 // pred_check_branch
          %855 = sbr.rel (%p853) target = $region48
        $region47: #{tpu_custom_call.1} parent=31 // pred_region
          %s856 = smul.u32 4, %s30
          %s858 = ssub.s32 512, 512
          %859 = vsyncadd %s844, %s858
          %s860 = smul.addr %s31, 4
          %s861 = sadd.s32 %s856, %s860
          %s862 = smul.addr %s861, 128
          %s863 = scalar_lea.hbm %s3, %s862
          %s864 = sshll.u32 %s847, 4
          %s865 = int_to_ptr.vmem [resolvable:$true] %s864
          %870 = dma.vmem_to_hbm [thread:$0]  %s865, 512, %s863, %s844, 128, 128, 8
        $region48: #{tpu_custom_call.1} parent=31 // pred_fallthru
          _
        // Predicated region
        $region49: #{tpu_custom_call.1} parent=31 // pred_check
          %p871 = pneg %p166
        $region50: #{tpu_custom_call.1} parent=31 // pred_check_branch
          %873 = sbr.rel (%p871) target = $region52
        $region51: #{tpu_custom_call.1} parent=31 // pred_region
          %s875 = ssub.s32 64, 64
          %876 = vsyncadd %s849, %s875
          %s877 = sadd.s32 %s30, %s31
          %s878 = smul.addr %s877, 64
          %s879 = scalar_lea.hbm %s4, %s878
          %s881 = sshll.u32 %s852, 4
          %s882 = int_to_ptr.vmem [resolvable:$true] %s881
          %884 = dma.vmem_to_hbm [thread:$0]  %s882, 64, %s879, %s849
        $region52: #{tpu_custom_call.1} parent=31 // pred_fallthru
          _
      $region32: #{tpu_custom_call.1} parent=5 // pred_fallthru
        _
      %p885 = scmp.le.s32.totalorder 2, %s21
      // Predicated region
      $region53: #{tpu_custom_call.1} parent=5 // pred_check
        %p886 = pneg %p885
      $region54: #{tpu_custom_call.1} parent=5 // pred_check_branch
        %888 = sbr.rel (%p886) target = $region56
      $region55: #{tpu_custom_call.1} parent=5 // pred_region
        %s889 = ssub.s32 %s21, 2
        // Predicated region
        $region57: #{tpu_custom_call.1} parent=55 // pred_check
          %p890 = pneg %p144
        $region58: #{tpu_custom_call.1} parent=55 // pred_check_branch
          %892 = sbr.rel (%p890) target = $region60
        $region59: #{tpu_custom_call.1} parent=55 // pred_region
          %s893 = sand.u32 %s129, 1
          %s894 = scalar_lea.sflag [#allocation4], %s893
          %s895 = sand.u32 %s129, 1
          %s896 = smul.addr %s895, 32
          %s897 = scalar_lea.vmem [#allocation8], %s896
          %898 = dma.done %s894, 512
        $region60: #{tpu_custom_call.1} parent=55 // pred_fallthru
          _
        // Predicated region
        $region61: #{tpu_custom_call.1} parent=55 // pred_check
          %p899 = pneg %p172
        $region62: #{tpu_custom_call.1} parent=55 // pred_check_branch
          %901 = sbr.rel (%p899) target = $region64
        $region63: #{tpu_custom_call.1} parent=55 // pred_region
          %s902 = sand.u32 %s157, 1
          %s903 = scalar_lea.sflag [#allocation10], %s902
          %s904 = sand.u32 %s157, 1
          %s905 = smul.addr %s904, 4
          %s906 = scalar_lea.vmem [#allocation9], %s905
          %907 = dma.done %s903, 64
        $region64: #{tpu_custom_call.1} parent=55 // pred_fallthru
          _
      $region56: #{tpu_custom_call.1} parent=5 // pred_fallthru
        _
    $region6: #{tpu_custom_call.1} parent=1 // loop_footer
      %s25 = sadd.s32 1, %s21
    $region7: #{tpu_custom_call.1} parent=1 // loop_footer_branch
      %20 = sbr.rel target = $region3
    $region8: #{tpu_custom_call.1} parent=1 // loop_exit
      _
    %908 = vsyncpa [#allocation3], 1
    %s909 = scalar_lea.sflag [#allocation3], 1
    %910 = vsyncpa %s909, 1
    %911 = vsyncpa [#allocation6], 1
    %912 = vsyncpa [#allocation4], 1
    %s913 = scalar_lea.sflag [#allocation4], 1
    %914 = vsyncpa %s913, 1
    %915 = vsyncpa [#allocation10], 1
    %s916 = scalar_lea.sflag [#allocation10], 1
    %917 = vsyncpa %s916, 1

</llo_original>
